<compile_context>
chip_gen: v7x
topology: tpu7x:2x2x1
jax: 0.10.0
libtpu: 0.0.40
codegen_flags: <defaults>
</compile_context>

<pallas_src>
import jax
import jax.numpy as jnp
from jax import lax
from jax.experimental import pallas as pl
from jax.experimental.pallas import tpu as pltpu

LN_EPS = 1e-5  # PyTorch nn.LayerNorm default


def resblock_kernel(x_ref, gamma_ref, beta_ref, w1t_ref, b1_ref, w2t_ref, b2_ref,
                    o_ref):
    # ---- LayerNorm over the feature (lane) dim, biased variance as in PyTorch.
    xf = x_ref[...].astype(jnp.float32)
    mean = jnp.mean(xf, axis=-1, keepdims=True)
    centered = xf - mean
    var = jnp.mean(centered * centered, axis=-1, keepdims=True)
    h = centered * lax.rsqrt(var + LN_EPS)
    h = h * gamma_ref[...] + beta_ref[...]
    del xf, centered  # keep live ranges short; x is re-read for the residual.

    # ---- lin1: h @ W1^T + b1  (weights pre-transposed to (D, D) = (in, out)).
    # MXU inputs in the weights' dtype (bf16 by default), f32 accumulate.
    h = jnp.dot(h.astype(w1t_ref.dtype), w1t_ref[...],
                preferred_element_type=jnp.float32) + b1_ref[...]

    # ---- Exact GELU (erf form), matching PyTorch's default nn.GELU().
    h = 0.5 * h * (1.0 + lax.erf(h * jnp.float32(0.7071067811865476)))

    # ---- Dropout: eval-mode semantics => identity.
    # TODO(synk): training-mode dropout (pltpu.prng_random_bits mask + 1/(1-p)
    # scaling) is not emitted here.

    # ---- lin2: h @ W2^T + b2
    h = jnp.dot(h.astype(w2t_ref.dtype), w2t_ref[...],
                preferred_element_type=jnp.float32) + b2_ref[...]

    # ---- Residual (re-read the VMEM tile instead of carrying x through).
    o_ref[...] = (x_ref[...].astype(jnp.float32) + h).astype(o_ref.dtype)


def resblock(x, gamma, beta, w1, b1, w2, b2, *, tile_b=None,
             mxu_dtype=jnp.bfloat16):
    """x: (B, D). w1, w2 are PyTorch-layout (out, in) = (D, D); b1, b2, gamma,
    beta: (D,). mxu_dtype controls the matmul-input/weight dtype (bf16 default,
    f32 accumulate); pass jnp.float32 for exact-f32 matmuls.

    Tip: keeping x (and the output) in bf16 in HBM halves activation traffic;
    the kernel always normalizes/accumulates in f32.
    """
    B, D = x.shape

    # Row-tile choice: ~256 rows fills the 256-wide MXU on v6e/v7x, but cap at
    # half the batch (sublane-rounded) so there are >=2 grid steps for
    # DMA/compute pipelining and v7x megacore sharding whenever B allows it.
    if tile_b is None:
        tile_b = min(256, max(8, -(-B // 2)))
    tile_b = -(-int(tile_b) // 8) * 8  # round up to sublane multiple of 8

    # Pad the batch so the grid covers it exactly (padded rows are dropped).
    n_tiles = -(-B // tile_b)
    b_pad = n_tiles * tile_b
    x_in = jnp.pad(x, ((0, b_pad - B), (0, 0))) if b_pad != B else x

    # Pre-transpose weights to (in, out); cast to the MXU dtype. 1-D params
    # become (1, D) rows for VMEM residency.
    w1t = jnp.transpose(w1).astype(mxu_dtype)
    w2t = jnp.transpose(w2).astype(mxu_dtype)
    gamma2 = gamma.reshape(1, D).astype(jnp.float32)
    beta2 = beta.reshape(1, D).astype(jnp.float32)
    b1_2 = b1.reshape(1, D).astype(jnp.float32)
    b2_2 = b2.reshape(1, D).astype(jnp.float32)

    x_spec = pl.BlockSpec((tile_b, D), lambda i: (i, 0))
    row_spec = pl.BlockSpec((1, D), lambda i: (0, 0))
    # Constant index_map -> the weights never change across grid steps; single
    # buffering avoids allocating a useless second VMEM copy of each (D, D).
    mat_spec = pl.BlockSpec((D, D), lambda i: (0, 0),
                            pipeline_mode=pl.Buffered(1))
    # TODO(synk): for very large D (>= ~2048, esp. v7x's 64 MiB VMEM), stream
    # weight tiles via a K-reduction grid axis instead of keeping (D, D) resident.

    # Explicit VMEM budget: x/out tiles double-buffered + resident weights +
    # f32 intermediates, with headroom (scoped defaults are 16/32 MiB).
    x_bytes = jnp.dtype(x.dtype).itemsize
    w_bytes = jnp.dtype(mxu_dtype).itemsize
    vmem_est = (
        2 * tile_b * D * x_bytes        # x tile (double-buffered)
        + 2 * tile_b * D * x_bytes      # out tile (double-buffered)
        + 2 * D * D * w_bytes           # two weight matrices (single-buffered)
        + 8 * D * 4                     # gamma/beta/b1/b2 rows
        + 4 * tile_b * D * 4            # in-kernel f32 temporaries
    )
    vmem_limit = int(min(max(2 * vmem_est, 16 * 1024 * 1024), 64 * 1024 * 1024))

    out = pl.pallas_call(
        resblock_kernel,
        out_shape=jax.ShapeDtypeStruct((b_pad, D), x.dtype),
        grid_spec=pltpu.PrefetchScalarGridSpec(
            num_scalar_prefetch=0,
            grid=(n_tiles,),
            in_specs=[x_spec, row_spec, row_spec, mat_spec, row_spec, mat_spec,
                      row_spec],
            out_specs=x_spec,
        ),
        compiler_params=pltpu.CompilerParams(
            dimension_semantics=("parallel",),
            vmem_limit_bytes=vmem_limit,
        ),
    )(x_in, gamma2, beta2, w1t, b1_2, w2t, b2_2)

    return out[:B] if b_pad != B else out


def resblock_ref(x, gamma, beta, w1, b1, w2, b2):
    """Pure-JAX f32 reference matching the PyTorch forward (eval mode)."""
    xf = x.astype(jnp.float32)
    mean = jnp.mean(xf, axis=-1, keepdims=True)
    var = jnp.mean((xf - mean) ** 2, axis=-1, keepdims=True)
    h = (xf - mean) / jnp.sqrt(var + LN_EPS)
    h = h * gamma + beta
    h = h @ w1.T + b1
    h = 0.5 * h * (1.0 + lax.erf(h / jnp.sqrt(2.0)))
    h = h @ w2.T + b2
    return (xf + h).astype(x.dtype)


if __name__ == "__main__":
    # Small demo shapes: B is NOT a multiple of the tile (exercises cdiv+padding)
    # and D=128 is aligned to the lane width.
    B, D = 50, 128
    key = jax.random.PRNGKey(0)
    kx, kw1, kb1, kw2, kb2 = jax.random.split(key, 5)

    x = jax.random.normal(kx, (B, D), dtype=jnp.float32)

    # Deterministic synthetic parameters (PyTorch nn.Linear-like scale).
    bound = 1.0 / jnp.sqrt(jnp.float32(D))
    w1 = jax.random.uniform(kw1, (D, D), jnp.float32, -bound, bound)
    b1 = jax.random.uniform(kb1, (D,), jnp.float32, -bound, bound)
    w2 = jax.random.uniform(kw2, (D, D), jnp.float32, -bound, bound)
    b2 = jax.random.uniform(kb2, (D,), jnp.float32, -bound, bound)
    gamma = jnp.ones((D,), jnp.float32)   # nn.LayerNorm init
    beta = jnp.zeros((D,), jnp.float32)

    ref = resblock_ref(x, gamma, beta, w1, b1, w2, b2)

    # Exact-f32 MXU path (tile_b=16 -> 4 grid steps + padding): tight check.
    out_f32 = resblock(x, gamma, beta, w1, b1, w2, b2, tile_b=16,
                       mxu_dtype=jnp.float32)
    out_f32 = jax.block_until_ready(out_f32)
    assert out_f32.shape == (B, D)
    assert jnp.max(jnp.abs(out_f32 - ref)) < 5e-4, "f32 path mismatch vs reference"

    # Default perf path (bf16 MXU inputs/weights, f32 accumulate): relaxed
    # tolerance -- documented numerics deviation from the exact-f32 reference.
    out = jax.block_until_ready(resblock(x, gamma, beta, w1, b1, w2, b2))
    assert out.shape == (B, D)
    assert jnp.max(jnp.abs(out - ref)) < 5e-2, "bf16 path mismatch vs reference"

    print("KERNEL_OK")
</pallas_src>

<mosaic_0001>
module attributes {stable_mosaic.version = 11 : i64} {
  func.func @resblock_kernel(%arg0: i32, %arg1: memref<16x128xf32, #tpu.memory_space<vmem>>, %arg2: memref<1x128xf32, #tpu.memory_space<vmem>>, %arg3: memref<1x128xf32, #tpu.memory_space<vmem>>, %arg4: memref<128x128xf32, #tpu.memory_space<vmem>>, %arg5: memref<1x128xf32, #tpu.memory_space<vmem>>, %arg6: memref<128x128xf32, #tpu.memory_space<vmem>>, %arg7: memref<1x128xf32, #tpu.memory_space<vmem>>, %arg8: memref<16x128xf32, #tpu.memory_space<vmem>>) attributes {dimension_semantics = [#tpu.dimension_semantics<parallel>], iteration_bounds = array<i64: 4>, scalar_prefetch = 0 : i64, scratch_operands = 0 : i64, tpu.core_type = #tpu.core_type<tc>, window_params = [{transform_indices = @transform_0, window_bounds = array<i64: 16, 128>}, {pipeline_mode = #tpu.pipeline_mode<synchronous>, transform_indices = @transform_1, window_bounds = array<i64: 1, 128>}, {pipeline_mode = #tpu.pipeline_mode<synchronous>, transform_indices = @transform_2, window_bounds = array<i64: 1, 128>}, {pipeline_mode = #tpu.pipeline_mode<synchronous>, transform_indices = @transform_3, window_bounds = array<i64: 128, 128>}, {pipeline_mode = #tpu.pipeline_mode<synchronous>, transform_indices = @transform_4, window_bounds = array<i64: 1, 128>}, {pipeline_mode = #tpu.pipeline_mode<synchronous>, transform_indices = @transform_5, window_bounds = array<i64: 128, 128>}, {pipeline_mode = #tpu.pipeline_mode<synchronous>, transform_indices = @transform_6, window_bounds = array<i64: 1, 128>}, {transform_indices = @transform_7, window_bounds = array<i64: 16, 128>}]} {
    %c0 = arith.constant 0 : index
    %c0_0 = arith.constant 0 : index
    %0 = vector.load %arg1[%c0, %c0_0] : memref<16x128xf32, #tpu.memory_space<vmem>>, vector<16x128xf32>
    %cst = arith.constant dense<0.000000e+00> : vector<16xf32>
    %1 = vector.multi_reduction <add>, %0, %cst [1] : vector<16x128xf32> to vector<16xf32>
    %2 = vector.shape_cast %1 : vector<16xf32> to vector<16x1xf32>
    %cst_1 = arith.constant 1.280000e+02 : f32
    %3 = vector.broadcast %cst_1 : f32 to vector<16x1xf32>
    %4 = arith.divf %2, %3 : vector<16x1xf32>
    %5 = vector.broadcast %4 : vector<16x1xf32> to vector<16x128xf32>
    %6 = arith.subf %0, %5 : vector<16x128xf32>
    %7 = arith.mulf %6, %6 : vector<16x128xf32>
    %cst_2 = arith.constant dense<0.000000e+00> : vector<16xf32>
    %8 = vector.multi_reduction <add>, %7, %cst_2 [1] : vector<16x128xf32> to vector<16xf32>
    %9 = vector.shape_cast %8 : vector<16xf32> to vector<16x1xf32>
    %cst_3 = arith.constant 1.280000e+02 : f32
    %10 = vector.broadcast %cst_3 : f32 to vector<16x1xf32>
    %11 = arith.divf %9, %10 : vector<16x1xf32>
    %cst_4 = arith.constant 9.99999974E-6 : f32
    %12 = vector.broadcast %cst_4 : f32 to vector<16x1xf32>
    %13 = arith.addf %11, %12 : vector<16x1xf32>
    %14 = math.rsqrt %13 : vector<16x1xf32>
    %15 = vector.broadcast %14 : vector<16x1xf32> to vector<16x128xf32>
    %16 = arith.mulf %6, %15 : vector<16x128xf32>
    %c0_5 = arith.constant 0 : index
    %c0_6 = arith.constant 0 : index
    %17 = vector.load %arg2[%c0_5, %c0_6] : memref<1x128xf32, #tpu.memory_space<vmem>>, vector<1x128xf32>
    %18 = vector.broadcast %17 : vector<1x128xf32> to vector<16x128xf32>
    %19 = arith.mulf %16, %18 : vector<16x128xf32>
    %c0_7 = arith.constant 0 : index
    %c0_8 = arith.constant 0 : index
    %20 = vector.load %arg3[%c0_7, %c0_8] : memref<1x128xf32, #tpu.memory_space<vmem>>, vector<1x128xf32>
    %21 = vector.broadcast %20 : vector<1x128xf32> to vector<16x128xf32>
    %22 = arith.addf %19, %21 : vector<16x128xf32>
    %c0_9 = arith.constant 0 : index
    %c0_10 = arith.constant 0 : index
    %23 = vector.load %arg4[%c0_9, %c0_10] : memref<128x128xf32, #tpu.memory_space<vmem>>, vector<128x128xf32>
    %cst_11 = arith.constant dense<0.000000e+00> : vector<16x128xf32>
    %24 = tpu.matmul %22, %23, %cst_11 {dimension_numbers = #tpu.dot_dimension_numbers<[1], [0], [0], [1], [0, 0, 1, 1], [], []>} : vector<16x128xf32>, vector<128x128xf32>, vector<16x128xf32> -> vector<16x128xf32>
    %c0_12 = arith.constant 0 : index
    %c0_13 = arith.constant 0 : index
    %25 = vector.load %arg5[%c0_12, %c0_13] : memref<1x128xf32, #tpu.memory_space<vmem>>, vector<1x128xf32>
    %26 = vector.broadcast %25 : vector<1x128xf32> to vector<16x128xf32>
    %27 = arith.addf %24, %26 : vector<16x128xf32>
    %cst_14 = arith.constant 5.000000e-01 : f32
    %28 = vector.broadcast %cst_14 : f32 to vector<16x128xf32>
    %29 = arith.mulf %28, %27 : vector<16x128xf32>
    %cst_15 = arith.constant 0.707106769 : f32
    %30 = vector.broadcast %cst_15 : f32 to vector<16x128xf32>
    %31 = arith.mulf %27, %30 : vector<16x128xf32>
    %32 = math.erf %31 : vector<16x128xf32>
    %cst_16 = arith.constant 1.000000e+00 : f32
    %33 = vector.broadcast %cst_16 : f32 to vector<16x128xf32>
    %34 = arith.addf %33, %32 : vector<16x128xf32>
    %35 = arith.mulf %29, %34 : vector<16x128xf32>
    %c0_17 = arith.constant 0 : index
    %c0_18 = arith.constant 0 : index
    %36 = vector.load %arg6[%c0_17, %c0_18] : memref<128x128xf32, #tpu.memory_space<vmem>>, vector<128x128xf32>
    %cst_19 = arith.constant dense<0.000000e+00> : vector<16x128xf32>
    %37 = tpu.matmul %35, %36, %cst_19 {dimension_numbers = #tpu.dot_dimension_numbers<[1], [0], [0], [1], [0, 0, 1, 1], [], []>} : vector<16x128xf32>, vector<128x128xf32>, vector<16x128xf32> -> vector<16x128xf32>
    %c0_20 = arith.constant 0 : index
    %c0_21 = arith.constant 0 : index
    %38 = vector.load %arg7[%c0_20, %c0_21] : memref<1x128xf32, #tpu.memory_space<vmem>>, vector<1x128xf32>
    %39 = vector.broadcast %38 : vector<1x128xf32> to vector<16x128xf32>
    %40 = arith.addf %37, %39 : vector<16x128xf32>
    %c0_22 = arith.constant 0 : index
    %c0_23 = arith.constant 0 : index
    %41 = vector.load %arg1[%c0_22, %c0_23] : memref<16x128xf32, #tpu.memory_space<vmem>>, vector<16x128xf32>
    %42 = arith.addf %41, %40 : vector<16x128xf32>
    %c0_24 = arith.constant 0 : index
    %c0_25 = arith.constant 0 : index
    %43 = vector.load %arg8[%c0_24, %c0_25] : memref<16x128xf32, #tpu.memory_space<vmem>>, vector<16x128xf32>
    tpu.vector_store %arg8[%c0_24, %c0_25], %42 {strides = array<i32>} : memref<16x128xf32, #tpu.memory_space<vmem>>, vector<16x128xf32>,
    return
  }
  func.func @transform_0(%arg0: i32) -> (i32, i32) {
    %c0_i32 = arith.constant 0 : i32
    %c0_i32_0 = arith.constant 0 : i32
    return %arg0, %c0_i32 : i32, i32
  }
  func.func @transform_1(%arg0: i32) -> (i32, i32) {
    %c0_i32 = arith.constant 0 : i32
    %c0_i32_0 = arith.constant 0 : i32
    %c0_i32_1 = arith.constant 0 : i32
    return %c0_i32, %c0_i32_0 : i32, i32
  }
  func.func @transform_2(%arg0: i32) -> (i32, i32) {
    %c0_i32 = arith.constant 0 : i32
    %c0_i32_0 = arith.constant 0 : i32
    %c0_i32_1 = arith.constant 0 : i32
    return %c0_i32, %c0_i32_0 : i32, i32
  }
  func.func @transform_3(%arg0: i32) -> (i32, i32) {
    %c0_i32 = arith.constant 0 : i32
    %c0_i32_0 = arith.constant 0 : i32
    %c0_i32_1 = arith.constant 0 : i32
    return %c0_i32, %c0_i32_0 : i32, i32
  }
  func.func @transform_4(%arg0: i32) -> (i32, i32) {
    %c0_i32 = arith.constant 0 : i32
    %c0_i32_0 = arith.constant 0 : i32
    %c0_i32_1 = arith.constant 0 : i32
    return %c0_i32, %c0_i32_0 : i32, i32
  }
  func.func @transform_5(%arg0: i32) -> (i32, i32) {
    %c0_i32 = arith.constant 0 : i32
    %c0_i32_0 = arith.constant 0 : i32
    %c0_i32_1 = arith.constant 0 : i32
    return %c0_i32, %c0_i32_0 : i32, i32
  }
  func.func @transform_6(%arg0: i32) -> (i32, i32) {
    %c0_i32 = arith.constant 0 : i32
    %c0_i32_0 = arith.constant 0 : i32
    %c0_i32_1 = arith.constant 0 : i32
    return %c0_i32, %c0_i32_0 : i32, i32
  }
  func.func @transform_7(%arg0: i32) -> (i32, i32) {
    %c0_i32 = arith.constant 0 : i32
    %c0_i32_0 = arith.constant 0 : i32
    return %arg0, %c0_i32 : i32, i32
  }
}

</mosaic_0001>

<llo_original>
// kernel: tpu_custom_call.1
$region0: #{tpu_custom_call.1}
  #allocation0 [shape = 'u32[]', space=smem, size = 0x4, offset = 0x4, fixed_abs, tag = 'smem constant byte address 0x4 - core index']
  #allocation1 [shape = 'u32[144,128]{1,0:T(1,128)}', space=vmem, size = 0x12000, scoped, tag = 'internal scratch']
  %s0 = inlined_call_operand.hbm [shape: f32[64,128], index: 0, kind: input, shape index: {}]
  %s1 = inlined_call_operand.vmem [shape: f32[1,128], index: 1, kind: input, shape index: {}]
  %s2 = inlined_call_operand.vmem [shape: f32[1,128], index: 2, kind: input, shape index: {}]
  %s3 = inlined_call_operand.hbm [shape: f32[128,128], index: 3, kind: input, shape index: {}]
  %s4 = inlined_call_operand.vmem [shape: f32[1,128], index: 4, kind: input, shape index: {}]
  %s5 = inlined_call_operand.hbm [shape: f32[128,128], index: 5, kind: input, shape index: {}]
  %s6 = inlined_call_operand.vmem [shape: f32[1,128], index: 6, kind: input, shape index: {}]
  %s7 = inlined_call_operand.hbm [shape: f32[64,128], index: 7, kind: output, shape index: {}]
  %s8 = sld [smem:[#allocation0]]
  $region73: #{tpu_custom_call.1} parent=0
    _
  %s10 = ssub.s32 1, %s8
  %s11 = scalar_select 0, %s10, %s8
  $region1: #{tpu_custom_call.1} parent=0
    #allocation2 [shape = 'u8[16384]{0}', space=vmem, size = 0x4000, scoped, tag = 'input window, operand 0']
    #allocation3 [shape = 's32[2]{0}', space=sflag, size = 0x8, scoped, tag = 'scoped memory for tpu_custom_call.1']
    #allocation4 [shape = 's32[2]{0}', space=sflag, size = 0x8, scoped, tag = 'scoped memory for tpu_custom_call.1']
    #allocation5 [shape = 'u8[65536]{0}', space=vmem, size = 0x10000, scoped, tag = 'input window, operand 3, single buffered']
    #allocation6 [shape = 's32[1]{0}', space=sflag, size = 0x4, scoped, tag = 'scoped memory for tpu_custom_call.1']
    #allocation7 [shape = 'u8[65536]{0}', space=vmem, size = 0x10000, scoped, tag = 'input window, operand 5, single buffered']
    #allocation8 [shape = 'u8[16384]{0}', space=vmem, size = 0x4000, scoped, tag = 'output window, operand 0']
    %12 = vsyncpa [#allocation3], 0
    %s13 = scalar_lea.sflag [#allocation3], 1
    %14 = vsyncpa %s13, 0
    %15 = vsyncpa [#allocation6], 0
    %16 = vsyncpa [#allocation4], 0
    %s17 = scalar_lea.sflag [#allocation4], 1
    %18 = vsyncpa %s17, 0
    loop: start=0, step=1, limit=6
    $region2: #{tpu_custom_call.1} parent=1 // loop_pre_header
      _
    $region3: #{tpu_custom_call.1} parent=1 // loop_header
      %s20 = sphi 0, %s24
      %p21 = scmp.ge.s32.totalorder %s20, 6
      %s30 = sphi 0, %s32
      %s33 = sphi 0, %s30
      %s34 = sphi 0, %s33
      %s50 = sphi 0, %s34
      %s54 = sphi 0, %s54
      %s56 = sphi 0, %s54
      %s57 = sphi 0, %s56
      %s71 = sphi 0, %s57
      %s75 = sphi 0, %s75
      %s77 = sphi 0, %s75
      %s78 = sphi 0, %s77
      %s92 = sphi 0, %s78
      %s96 = sphi 0, %s96
      %s98 = sphi 0, %s96
      %s99 = sphi 0, %s98
      %s113 = sphi 0, %s99
      %s117 = sphi 0, %s117
      %s119 = sphi 0, %s117
      %s120 = sphi 0, %s119
      %s134 = sphi 0, %s120
      %s138 = sphi 0, %s138
      %s140 = sphi 0, %s138
      %s141 = sphi 0, %s140
      %s155 = sphi 0, %s141
      %s159 = sphi 0, %s159
      %s161 = sphi 0, %s159
      %s162 = sphi 0, %s161
      %s176 = sphi 0, %s162
      %s182 = sphi 0, %s184
      %s185 = sphi 0, %s182
      %s186 = sphi 0, %s185
      %s202 = sphi 0, %s186
    $region4: #{tpu_custom_call.1} parent=1 // loop_header_branch
      %23 = sbr.rel (%p21) target = $region8
    $region5: #{tpu_custom_call.1} parent=1 // loop_body
      %s25 = ssub.s32 %s20, 1
      %s26 = ssub.s32 %s20, 2
      %s27 = sadd.s32 %s20, 1
      %s28 = ssub.s32 %s20, %s27
      %p29 = scmp.eq.s32.totalorder %s28, 0
      %s31 = sadd.s32 %s30, 1
      %s32 = scalar_select %p29, %s30, %s31
      %p35 = pneg %p29
      %p36 = scmp.eq.s32.totalorder %s20, 3
      %p37 = por %p35, %p36
      %p38 = scmp.ne.s32.totalorder %s30, %s33
      %p39 = scmp.eq.s32.totalorder %s20, 0
      %p40 = por %p38, %p39
      %p41 = scmp.ne.s32.totalorder %s30, %s33
      %p42 = scmp.eq.s32.totalorder %s25, 3
      %p43 = por %p41, %p42
      %p44 = scmp.ne.s32.totalorder %s33, %s34
      %p45 = scmp.eq.s32.totalorder %s25, 0
      %p46 = por %p44, %p45
      %p47 = scmp.ne.s32.totalorder %s33, %s34
      %p48 = scmp.eq.s32.totalorder %s26, 3
      %p49 = por %p47, %p48
      %p51 = scmp.ne.s32.totalorder %s34, %s50
      %p52 = scmp.eq.s32.totalorder %s26, 0
      %p53 = por %p51, %p52
      %s55 = sadd.s32 %s54, 1
      %p58 = scmp.eq.s32.totalorder %s20, 3
      %p59 = scmp.ne.s32.totalorder %s54, %s56
      %p60 = scmp.eq.s32.totalorder %s20, 0
      %p61 = por %p59, %p60
      %p62 = scmp.ne.s32.totalorder %s54, %s56
      %p63 = scmp.eq.s32.totalorder %s25, 3
      %p64 = por %p62, %p63
      %p65 = scmp.ne.s32.totalorder %s56, %s57
      %p66 = scmp.eq.s32.totalorder %s25, 0
      %p67 = por %p65, %p66
      %p68 = scmp.ne.s32.totalorder %s56, %s57
      %p69 = scmp.eq.s32.totalorder %s26, 3
      %p70 = por %p68, %p69
      %p72 = scmp.ne.s32.totalorder %s57, %s71
      %p73 = scmp.eq.s32.totalorder %s26, 0
      %p74 = por %p72, %p73
      %s76 = sadd.s32 %s75, 1
      %p79 = scmp.eq.s32.totalorder %s20, 3
      %p80 = scmp.ne.s32.totalorder %s75, %s77
      %p81 = scmp.eq.s32.totalorder %s20, 0
      %p82 = por %p80, %p81
      %p83 = scmp.ne.s32.totalorder %s75, %s77
      %p84 = scmp.eq.s32.totalorder %s25, 3
      %p85 = por %p83, %p84
      %p86 = scmp.ne.s32.totalorder %s77, %s78
      %p87 = scmp.eq.s32.totalorder %s25, 0
      %p88 = por %p86, %p87
      %p89 = scmp.ne.s32.totalorder %s77, %s78
      %p90 = scmp.eq.s32.totalorder %s26, 3
      %p91 = por %p89, %p90
      %p93 = scmp.ne.s32.totalorder %s78, %s92
      %p94 = scmp.eq.s32.totalorder %s26, 0
      %p95 = por %p93, %p94
      %s97 = sadd.s32 %s96, 1
      %p100 = scmp.eq.s32.totalorder %s20, 3
      %p101 = scmp.ne.s32.totalorder %s96, %s98
      %p102 = scmp.eq.s32.totalorder %s20, 0
      %p103 = por %p101, %p102
      %p104 = scmp.ne.s32.totalorder %s96, %s98
      %p105 = scmp.eq.s32.totalorder %s25, 3
      %p106 = por %p104, %p105
      %p107 = scmp.ne.s32.totalorder %s98, %s99
      %p108 = scmp.eq.s32.totalorder %s25, 0
      %p109 = por %p107, %p108
      %p110 = scmp.ne.s32.totalorder %s98, %s99
      %p111 = scmp.eq.s32.totalorder %s26, 3
      %p112 = por %p110, %p111
      %p114 = scmp.ne.s32.totalorder %s99, %s113
      %p115 = scmp.eq.s32.totalorder %s26, 0
      %p116 = por %p114, %p115
      %s118 = sadd.s32 %s117, 1
      %p121 = scmp.eq.s32.totalorder %s20, 3
      %p122 = scmp.ne.s32.totalorder %s117, %s119
      %p123 = scmp.eq.s32.totalorder %s20, 0
      %p124 = por %p122, %p123
      %p125 = scmp.ne.s32.totalorder %s117, %s119
      %p126 = scmp.eq.s32.totalorder %s25, 3
      %p127 = por %p125, %p126
      %p128 = scmp.ne.s32.totalorder %s119, %s120
      %p129 = scmp.eq.s32.totalorder %s25, 0
      %p130 = por %p128, %p129
      %p131 = scmp.ne.s32.totalorder %s119, %s120
      %p132 = scmp.eq.s32.totalorder %s26, 3
      %p133 = por %p131, %p132
      %p135 = scmp.ne.s32.totalorder %s120, %s134
      %p136 = scmp.eq.s32.totalorder %s26, 0
      %p137 = por %p135, %p136
      %s139 = sadd.s32 %s138, 1
      %p142 = scmp.eq.s32.totalorder %s20, 3
      %p143 = scmp.ne.s32.totalorder %s138, %s140
      %p144 = scmp.eq.s32.totalorder %s20, 0
      %p145 = por %p143, %p144
      %p146 = scmp.ne.s32.totalorder %s138, %s140
      %p147 = scmp.eq.s32.totalorder %s25, 3
      %p148 = por %p146, %p147
      %p149 = scmp.ne.s32.totalorder %s140, %s141
      %p150 = scmp.eq.s32.totalorder %s25, 0
      %p151 = por %p149, %p150
      %p152 = scmp.ne.s32.totalorder %s140, %s141
      %p153 = scmp.eq.s32.totalorder %s26, 3
      %p154 = por %p152, %p153
      %p156 = scmp.ne.s32.totalorder %s141, %s155
      %p157 = scmp.eq.s32.totalorder %s26, 0
      %p158 = por %p156, %p157
      %s160 = sadd.s32 %s159, 1
      %p163 = scmp.eq.s32.totalorder %s20, 3
      %p164 = scmp.ne.s32.totalorder %s159, %s161
      %p165 = scmp.eq.s32.totalorder %s20, 0
      %p166 = por %p164, %p165
      %p167 = scmp.ne.s32.totalorder %s159, %s161
      %p168 = scmp.eq.s32.totalorder %s25, 3
      %p169 = por %p167, %p168
      %p170 = scmp.ne.s32.totalorder %s161, %s162
      %p171 = scmp.eq.s32.totalorder %s25, 0
      %p172 = por %p170, %p171
      %p173 = scmp.ne.s32.totalorder %s161, %s162
      %p174 = scmp.eq.s32.totalorder %s26, 3
      %p175 = por %p173, %p174
      %p177 = scmp.ne.s32.totalorder %s162, %s176
      %p178 = scmp.eq.s32.totalorder %s26, 0
      %p179 = por %p177, %p178
      %s180 = ssub.s32 %s20, %s27
      %p181 = scmp.eq.s32.totalorder %s180, 0
      %s183 = sadd.s32 %s182, 1
      %s184 = scalar_select %p181, %s182, %s183
      %p187 = pneg %p181
      %p188 = scmp.eq.s32.totalorder %s20, 3
      %p189 = por %p187, %p188
      %p190 = scmp.ne.s32.totalorder %s182, %s185
      %p191 = scmp.eq.s32.totalorder %s20, 0
      %p192 = por %p190, %p191
      %p193 = scmp.ne.s32.totalorder %s182, %s185
      %p194 = scmp.eq.s32.totalorder %s25, 3
      %p195 = por %p193, %p194
      %p196 = scmp.ne.s32.totalorder %s185, %s186
      %p197 = scmp.eq.s32.totalorder %s25, 0
      %p198 = por %p196, %p197
      %p199 = scmp.ne.s32.totalorder %s185, %s186
      %p200 = scmp.eq.s32.totalorder %s26, 3
      %p201 = por %p199, %p200
      %p203 = scmp.ne.s32.totalorder %s186, %s202
      %p204 = scmp.eq.s32.totalorder %s26, 0
      %p205 = por %p203, %p204
      %p206 = scmp.le.s32.totalorder 1, %s20
      %p207 = scmp.lt.s32.totalorder %s20, 5
      %p208 = pnand %p206, %p207
      %p209 = pneg %p208
      // Predicated region
      $region9: #{tpu_custom_call.1} parent=5 // pred_check
        _
      $region10: #{tpu_custom_call.1} parent=5 // pred_check_branch
        %211 = sbr.rel (%p208) target = $region12
      $region11: #{tpu_custom_call.1} parent=5 // pred_region
        %s212 = ssub.s32 %s20, 1
        // Predicated region
        $region13: #{tpu_custom_call.1} parent=11 // pred_check
          %p213 = pneg %p67
        $region14: #{tpu_custom_call.1} parent=11 // pred_check_branch
          %215 = sbr.rel (%p213) target = $region16
        $region15: #{tpu_custom_call.1} parent=11 // pred_region
          _
        $region16: #{tpu_custom_call.1} parent=11 // pred_fallthru
          _
        // Predicated region
        $region17: #{tpu_custom_call.1} parent=11 // pred_check
          %p216 = pneg %p88
        $region18: #{tpu_custom_call.1} parent=11 // pred_check_branch
          %218 = sbr.rel (%p216) target = $region20
        $region19: #{tpu_custom_call.1} parent=11 // pred_region
          _
        $region20: #{tpu_custom_call.1} parent=11 // pred_fallthru
          _
        // Predicated region
        $region21: #{tpu_custom_call.1} parent=11 // pred_check
          %p219 = pneg %p109
        $region22: #{tpu_custom_call.1} parent=11 // pred_check_branch
          %221 = sbr.rel (%p219) target = $region24
        $region23: #{tpu_custom_call.1} parent=11 // pred_region
          %s223 = ssub.s32 2048, 2048
          %224 = vsyncadd [#allocation6], %s223
          %s225 = sshll.u32 [#allocation5], 4
          %s226 = int_to_ptr.vmem [resolvable:$true] %s225
          %231 = dma.hbm_to_vmem [thread:$0]  %s3, 2048, %s226, [#allocation6], 128, 128, 8
        $region24: #{tpu_custom_call.1} parent=11 // pred_fallthru
          _
        // Predicated region
        $region25: #{tpu_custom_call.1} parent=11 // pred_check
          %p232 = pneg %p130
        $region26: #{tpu_custom_call.1} parent=11 // pred_check_branch
          %234 = sbr.rel (%p232) target = $region28
        $region27: #{tpu_custom_call.1} parent=11 // pred_region
          _
        $region28: #{tpu_custom_call.1} parent=11 // pred_fallthru
          _
        // Predicated region
        $region29: #{tpu_custom_call.1} parent=11 // pred_check
          %p235 = pneg %p151
        $region30: #{tpu_custom_call.1} parent=11 // pred_check_branch
          %237 = sbr.rel (%p235) target = $region32
        $region31: #{tpu_custom_call.1} parent=11 // pred_region
          %s239 = ssub.s32 2048, 2048
          %240 = vsyncadd [#allocation6], %s239
          %s241 = sshll.u32 [#allocation7], 4
          %s242 = int_to_ptr.vmem [resolvable:$true] %s241
          %247 = dma.hbm_to_vmem [thread:$0]  %s5, 2048, %s242, [#allocation6], 128, 128, 8
        $region32: #{tpu_custom_call.1} parent=11 // pred_fallthru
          _
        // Predicated region
        $region33: #{tpu_custom_call.1} parent=11 // pred_check
          %p248 = pneg %p172
        $region34: #{tpu_custom_call.1} parent=11 // pred_check_branch
          %250 = sbr.rel (%p248) target = $region36
        $region35: #{tpu_custom_call.1} parent=11 // pred_region
          _
        $region36: #{tpu_custom_call.1} parent=11 // pred_fallthru
          _
      $region12: #{tpu_custom_call.1} parent=5 // pred_fallthru
        _
      %p251 = scmp.lt.s32.totalorder %s20, 4
      // Predicated region
      $region37: #{tpu_custom_call.1} parent=5 // pred_check
        %p252 = pneg %p251
      $region38: #{tpu_custom_call.1} parent=5 // pred_check_branch
        %254 = sbr.rel (%p252) target = $region40
      $region39: #{tpu_custom_call.1} parent=5 // pred_region
        // Predicated region
        $region41: #{tpu_custom_call.1} parent=39 // pred_check
          %p255 = pneg %p40
        $region42: #{tpu_custom_call.1} parent=39 // pred_check_branch
          %257 = sbr.rel (%p255) target = $region44
        $region43: #{tpu_custom_call.1} parent=39 // pred_region
          %s258 = sand.u32 %s30, 1
          %s259 = scalar_lea.sflag [#allocation3], %s258
          %s260 = sand.u32 %s30, 1
          %s261 = smul.addr %s260, 16
          %s262 = scalar_lea.vmem [#allocation2], %s261
          %s263 = smul.u32 2, %s20
          %s265 = ssub.s32 256, 256
          %266 = vsyncadd %s259, %s265
          %s267 = smul.addr %s263, 128
          %s268 = scalar_lea.hbm %s0, %s267
          %s269 = sshll.u32 %s262, 4
          %s270 = int_to_ptr.vmem [resolvable:$true] %s269
          %275 = dma.hbm_to_vmem [thread:$0]  %s268, 256, %s270, %s259, 128, 128, 8
        $region44: #{tpu_custom_call.1} parent=39 // pred_fallthru
          _
      $region40: #{tpu_custom_call.1} parent=5 // pred_fallthru
        _
      %p276 = scmp.le.s32.totalorder 1, %s20
      %p277 = scmp.lt.s32.totalorder %s20, 5
      %p278 = pnand %p276, %p277
      %p279 = pneg %p278
      // Predicated region
      $region45: #{tpu_custom_call.1} parent=5 // pred_check
        _
      $region46: #{tpu_custom_call.1} parent=5 // pred_check_branch
        %281 = sbr.rel (%p278) target = $region48
      $region47: #{tpu_custom_call.1} parent=5 // pred_region
        %s282 = ssub.s32 %s20, 1
        %s283 = sand.u32 %s33, 1
        %s284 = scalar_lea.sflag [#allocation3], %s283
        %s285 = sand.u32 %s33, 1
        %s286 = smul.addr %s285, 16
        %s287 = scalar_lea.vmem [#allocation2], %s286
        // Predicated region
        $region49: #{tpu_custom_call.1} parent=47 // pred_check
          %p288 = pneg %p46
        $region50: #{tpu_custom_call.1} parent=47 // pred_check_branch
          %290 = sbr.rel (%p288) target = $region52
        $region51: #{tpu_custom_call.1} parent=47 // pred_region
          %291 = dma.done %s284, 256
        $region52: #{tpu_custom_call.1} parent=47 // pred_fallthru
          _
        // Predicated region
        $region53: #{tpu_custom_call.1} parent=47 // pred_check
          %p292 = pneg %p109
        $region54: #{tpu_custom_call.1} parent=47 // pred_check_branch
          %294 = sbr.rel (%p292) target = $region56
        $region55: #{tpu_custom_call.1} parent=47 // pred_region
          %295 = dma.done [#allocation6], 2048
        $region56: #{tpu_custom_call.1} parent=47 // pred_fallthru
          _
        // Predicated region
        $region57: #{tpu_custom_call.1} parent=47 // pred_check
          %p296 = pneg %p151
        $region58: #{tpu_custom_call.1} parent=47 // pred_check_branch
          %298 = sbr.rel (%p296) target = $region60
        $region59: #{tpu_custom_call.1} parent=47 // pred_region
          %299 = dma.done [#allocation6], 2048
        $region60: #{tpu_custom_call.1} parent=47 // pred_fallthru
          _
        %s300 = sand.u32 %s33, 1
        %s301 = scalar_lea.sflag [#allocation3], %s300
        %s302 = sand.u32 %s33, 1
        %s303 = smul.addr %s302, 16
        %s304 = scalar_lea.vmem [#allocation2], %s303
        %p305 = pneg %p46
        %p306 = pneg %p43
        %p307 = pneg %p67
        %p308 = pneg %p64
        %p309 = pneg %p88
        %p310 = pneg %p85
        %p311 = pneg %p109
        %p312 = pneg %p106
        %p313 = pneg %p130
        %p314 = pneg %p127
        %p315 = pneg %p151
        %p316 = pneg %p148
        %p317 = pneg %p172
        %p318 = pneg %p169
        %p319 = pneg %p198
        %p320 = pneg %p195
        %s321 = sand.u32 %s185, 1
        %s322 = scalar_lea.sflag [#allocation4], %s321
        %s323 = sand.u32 %s185, 1
        %s324 = smul.addr %s323, 16
        %s325 = scalar_lea.vmem [#allocation8], %s324
        %s326 = smul.u32 2, %s25
        %s327 = smul.u32 2, %s25
        %v328 = vld [vmem:[%s287] sm:$0xff]
        %v329 = vld [vmem:[%s287 + $0x8] sm:$0xff]
        %330 = vadd.xlane.f32.xlu0 %v328
        %v331 = vpop.xlane.xlu0 %330
        %332 = vadd.xlane.f32.xlu0 %v329
        %v333 = vpop.xlane.xlu0 %332
        %v334 = vrcp.pop 128.0
        %v335 = vmul.f32 %v331, %v334
        %v336 = vmul.f32 %v333, %v334
        %v337 = vsub.f32 %v328, %v335
        %v338 = vsub.f32 %v329, %v336
        %v339 = vmul.f32 %v337, %v337
        %v340 = vmul.f32 %v338, %v338
        %341 = vadd.xlane.f32.xlu0 %v339
        %v342 = vpop.xlane.xlu0 %341
        %343 = vadd.xlane.f32.xlu0 %v340
        %v344 = vpop.xlane.xlu0 %343
        %v345 = vmul.f32 %v342, %v334
        %v346 = vmul.f32 %v344, %v334
        %v347 = vadd.f32 %v345, 1e-05
        %v348 = vadd.f32 %v346, 1e-05
        %v349 = vrsqrt.pop %v347
        %v350 = vrsqrt.pop %v348
        %v351 = vmul.f32 %v337, %v349
        %v352 = vmul.f32 %v338, %v350
        %v353 = vld [vmem:[%s1] sm:$0x1]
        %v355 = vlaneseq
        %v356 = vshrl.u32 %v355, 7
        %v357 = vsub.s32 0, %v356
        %v358 = vrot.slane %v353, %v357
        %v360 = vmul.f32 %v351, %v358
        %v361 = vmul.f32 %v352, %v358
        %v362 = vld [vmem:[%s2] sm:$0x1]
        %v364 = vlaneseq
        %v365 = vshrl.u32 %v364, 7
        %v366 = vsub.s32 0, %v365
        %v367 = vrot.slane %v362, %v366
        %v369 = vadd.f32 %v360, %v367
        %v370 = vadd.f32 %v361, %v367
        %v371 = vld [vmem:[#allocation5] sm:$0xff]
        %v372 = vld [vmem:[#allocation5 + $0x8] sm:$0xff]
        %v373 = vld [vmem:[#allocation5 + $0x10] sm:$0xff]
        %v374 = vld [vmem:[#allocation5 + $0x18] sm:$0xff]
        %v375 = vld [vmem:[#allocation5 + $0x20] sm:$0xff]
        %v376 = vld [vmem:[#allocation5 + $0x28] sm:$0xff]
        %v377 = vld [vmem:[#allocation5 + $0x30] sm:$0xff]
        %v378 = vld [vmem:[#allocation5 + $0x38] sm:$0xff]
        %v379 = vld [vmem:[#allocation5 + $0x40] sm:$0xff]
        %v380 = vld [vmem:[#allocation5 + $0x48] sm:$0xff]
        %v381 = vld [vmem:[#allocation5 + $0x50] sm:$0xff]
        %v382 = vld [vmem:[#allocation5 + $0x58] sm:$0xff]
        %v383 = vld [vmem:[#allocation5 + $0x60] sm:$0xff]
        %v384 = vld [vmem:[#allocation5 + $0x68] sm:$0xff]
        %v385 = vld [vmem:[#allocation5 + $0x70] sm:$0xff]
        %v386 = vld [vmem:[#allocation5 + $0x78] sm:$0xff]
        %v387 = vld [vmem:[%s4] sm:$0x1]
        %v389 = vlaneseq
        %v390 = vshrl.u32 %v389, 7
        %v391 = vsub.s32 0, %v390
        %v392 = vrot.slane %v387, %v391
        %394 = vmatprep.subr.mxu0 0.0
        %395 = vmatpush1.msra.mxu0 %v371
        %396 = vmatprep.subr.mxu0 0.0
        %397 = vmatpush1.msra.mxu0 %v372
        %398 = vmatprep.subr.mxu0 0.0
        %399 = vmatpush1.msra.mxu0 %v373
        %400 = vmatprep.subr.mxu0 0.0
        %401 = vmatpush1.msra.mxu0 %v374
        %402 = vmatprep.subr.mxu0 0.0
        %403 = vmatpush1.msra.mxu0 %v375
        %404 = vmatprep.subr.mxu0 0.0
        %405 = vmatpush1.msra.mxu0 %v376
        %406 = vmatprep.subr.mxu0 0.0
        %407 = vmatpush1.msra.mxu0 %v377
        %408 = vmatprep.subr.mxu0 0.0
        %409 = vmatpush1.msra.mxu0 %v378
        %410 = vmatprep.subr.mxu0 0.0
        %411 = vmatpush1.msra.mxu0 %v379
        %412 = vmatprep.subr.mxu0 0.0
        %413 = vmatpush1.msra.mxu0 %v380
        %414 = vmatprep.subr.mxu0 0.0
        %415 = vmatpush1.msra.mxu0 %v381
        %416 = vmatprep.subr.mxu0 0.0
        %417 = vmatpush1.msra.mxu0 %v382
        %418 = vmatprep.subr.mxu0 0.0
        %419 = vmatpush1.msra.mxu0 %v383
        %420 = vmatprep.subr.mxu0 0.0
        %421 = vmatpush1.msra.mxu0 %v384
        %422 = vmatprep.subr.mxu0 0.0
        %423 = vmatpush1.msra.mxu0 %v385
        %424 = vmatprep.subr.mxu0 0.0
        %425 = vmatpush1.msra.mxu0 %v386
        %426 = vmatprep.subr.mxu0 0.0
        %427 = vmatpush1.msra.mxu0 0.0
        %428 = vmatprep.subr.mxu0 0.0
        %429 = vmatpush1.msra.mxu0 0.0
        %430 = vmatprep.subr.mxu0 0.0
        %431 = vmatpush1.msra.mxu0 0.0
        %432 = vmatprep.subr.mxu0 0.0
        %433 = vmatpush1.msra.mxu0 0.0
        %434 = vmatprep.subr.mxu0 0.0
        %435 = vmatpush1.msra.mxu0 0.0
        %436 = vmatprep.subr.mxu0 0.0
        %437 = vmatpush1.msra.mxu0 0.0
        %438 = vmatprep.subr.mxu0 0.0
        %439 = vmatpush1.msra.mxu0 0.0
        %440 = vmatprep.subr.mxu0 0.0
        %441 = vmatpush1.msra.mxu0 0.0
        %442 = vmatprep.subr.mxu0 0.0
        %443 = vmatpush1.msra.mxu0 0.0
        %444 = vmatprep.subr.mxu0 0.0
        %445 = vmatpush1.msra.mxu0 0.0
        %446 = vmatprep.subr.mxu0 0.0
        %447 = vmatpush1.msra.mxu0 0.0
        %448 = vmatprep.subr.mxu0 0.0
        %449 = vmatpush1.msra.mxu0 0.0
        %450 = vmatprep.subr.mxu0 0.0
        %451 = vmatpush1.msra.mxu0 0.0
        %452 = vmatprep.subr.mxu0 0.0
        %453 = vmatpush1.msra.mxu0 0.0
        %454 = vmatprep.subr.mxu0 0.0
        %455 = vmatpush1.msra.mxu0 0.0
        %456 = vmatprep.subr.mxu0 0.0
        %457 = vmatpush1.msra.mxu0 0.0
        %458 = vmatprep.mubr.f32.mxu0 0.0
        %459 = vmatmul.mubr.f32.gmra.mrb[0].mxu0 %v369
        %v460 = vpop.f32.mrb[0].mxu0
        %v461 = vadd.f32 %v392, %v460
        %v462 = vpop.f32.mrb[0].mxu0
        %463 = vmatprep.mubr.f32.mxu0 0.0
        %464 = vmatmul.mubr.f32.gmra.mrb[0].mxu0 %v370
        %v465 = vpop.f32.mrb[0].mxu0
        %v466 = vadd.f32 %v392, %v465
        %v467 = vpop.f32.mrb[0].mxu0
        %468 = vdwg.mxu0
        %v469 = vmul.f32 %v461, 0.5
        %v470 = vmul.f32 %v466, 0.5
        %v471 = vmul.f32 %v461, 0.70710677
        %v472 = vmul.f32 %v466, 0.70710677
        %v473 = verf.f32.pop %v471
        %v474 = verf.f32.pop %v472
        %v475 = vadd.f32 %v473, 1.0
        %v476 = vadd.f32 %v474, 1.0
        %v477 = vmul.f32 %v469, %v475
        %v478 = vmul.f32 %v470, %v476
        %v479 = vld [vmem:[#allocation7] sm:$0xff]
        %v480 = vld [vmem:[#allocation7 + $0x8] sm:$0xff]
        %v481 = vld [vmem:[#allocation7 + $0x10] sm:$0xff]
        %v482 = vld [vmem:[#allocation7 + $0x18] sm:$0xff]
        %v483 = vld [vmem:[#allocation7 + $0x20] sm:$0xff]
        %v484 = vld [vmem:[#allocation7 + $0x28] sm:$0xff]
        %v485 = vld [vmem:[#allocation7 + $0x30] sm:$0xff]
        %v486 = vld [vmem:[#allocation7 + $0x38] sm:$0xff]
        %v487 = vld [vmem:[#allocation7 + $0x40] sm:$0xff]
        %v488 = vld [vmem:[#allocation7 + $0x48] sm:$0xff]
        %v489 = vld [vmem:[#allocation7 + $0x50] sm:$0xff]
        %v490 = vld [vmem:[#allocation7 + $0x58] sm:$0xff]
        %v491 = vld [vmem:[#allocation7 + $0x60] sm:$0xff]
        %v492 = vld [vmem:[#allocation7 + $0x68] sm:$0xff]
        %v493 = vld [vmem:[#allocation7 + $0x70] sm:$0xff]
        %v494 = vld [vmem:[#allocation7 + $0x78] sm:$0xff]
        %v495 = vld [vmem:[%s6] sm:$0x1]
        %v497 = vlaneseq
        %v498 = vshrl.u32 %v497, 7
        %v499 = vsub.s32 0, %v498
        %v500 = vrot.slane %v495, %v499
        %502 = vmatprep.subr.mxu0 0.0
        %503 = vmatpush1.msra.mxu0 %v479
        %504 = vmatprep.subr.mxu0 0.0
        %505 = vmatpush1.msra.mxu0 %v480
        %506 = vmatprep.subr.mxu0 0.0
        %507 = vmatpush1.msra.mxu0 %v481
        %508 = vmatprep.subr.mxu0 0.0
        %509 = vmatpush1.msra.mxu0 %v482
        %510 = vmatprep.subr.mxu0 0.0
        %511 = vmatpush1.msra.mxu0 %v483
        %512 = vmatprep.subr.mxu0 0.0
        %513 = vmatpush1.msra.mxu0 %v484
        %514 = vmatprep.subr.mxu0 0.0
        %515 = vmatpush1.msra.mxu0 %v485
        %516 = vmatprep.subr.mxu0 0.0
        %517 = vmatpush1.msra.mxu0 %v486
        %518 = vmatprep.subr.mxu0 0.0
        %519 = vmatpush1.msra.mxu0 %v487
        %520 = vmatprep.subr.mxu0 0.0
        %521 = vmatpush1.msra.mxu0 %v488
        %522 = vmatprep.subr.mxu0 0.0
        %523 = vmatpush1.msra.mxu0 %v489
        %524 = vmatprep.subr.mxu0 0.0
        %525 = vmatpush1.msra.mxu0 %v490
        %526 = vmatprep.subr.mxu0 0.0
        %527 = vmatpush1.msra.mxu0 %v491
        %528 = vmatprep.subr.mxu0 0.0
        %529 = vmatpush1.msra.mxu0 %v492
        %530 = vmatprep.subr.mxu0 0.0
        %531 = vmatpush1.msra.mxu0 %v493
        %532 = vmatprep.subr.mxu0 0.0
        %533 = vmatpush1.msra.mxu0 %v494
        %534 = vmatprep.subr.mxu0 0.0
        %535 = vmatpush1.msra.mxu0 0.0
        %536 = vmatprep.subr.mxu0 0.0
        %537 = vmatpush1.msra.mxu0 0.0
        %538 = vmatprep.subr.mxu0 0.0
        %539 = vmatpush1.msra.mxu0 0.0
        %540 = vmatprep.subr.mxu0 0.0
        %541 = vmatpush1.msra.mxu0 0.0
        %542 = vmatprep.subr.mxu0 0.0
        %543 = vmatpush1.msra.mxu0 0.0
        %544 = vmatprep.subr.mxu0 0.0
        %545 = vmatpush1.msra.mxu0 0.0
        %546 = vmatprep.subr.mxu0 0.0
        %547 = vmatpush1.msra.mxu0 0.0
        %548 = vmatprep.subr.mxu0 0.0
        %549 = vmatpush1.msra.mxu0 0.0
        %550 = vmatprep.subr.mxu0 0.0
        %551 = vmatpush1.msra.mxu0 0.0
        %552 = vmatprep.subr.mxu0 0.0
        %553 = vmatpush1.msra.mxu0 0.0
        %554 = vmatprep.subr.mxu0 0.0
        %555 = vmatpush1.msra.mxu0 0.0
        %556 = vmatprep.subr.mxu0 0.0
        %557 = vmatpush1.msra.mxu0 0.0
        %558 = vmatprep.subr.mxu0 0.0
        %559 = vmatpush1.msra.mxu0 0.0
        %560 = vmatprep.subr.mxu0 0.0
        %561 = vmatpush1.msra.mxu0 0.0
        %562 = vmatprep.subr.mxu0 0.0
        %563 = vmatpush1.msra.mxu0 0.0
        %564 = vmatprep.subr.mxu0 0.0
        %565 = vmatpush1.msra.mxu0 0.0
        %566 = vmatprep.mubr.f32.mxu0 0.0
        %567 = vmatmul.mubr.f32.gmra.mrb[0].mxu0 %v477
        %v568 = vpop.f32.mrb[0].mxu0
        %v569 = vadd.f32 %v500, %v568
        %v570 = vpop.f32.mrb[0].mxu0
        %571 = vmatprep.mubr.f32.mxu0 0.0
        %572 = vmatmul.mubr.f32.gmra.mrb[0].mxu0 %v478
        %v573 = vpop.f32.mrb[0].mxu0
        %v574 = vadd.f32 %v500, %v573
        %v575 = vpop.f32.mrb[0].mxu0
        %576 = vdwg.mxu0
        %v577 = vadd.f32 %v328, %v569
        %v578 = vadd.f32 %v329, %v574
        %579 = vst [vmem:[%s325] sm:$0xff] %v577
        %580 = vst [vmem:[%s325 + $0x8] sm:$0xff] %v578
        %s581 = sand.u32 %s185, 1
        %s582 = scalar_lea.sflag [#allocation4], %s581
        %s583 = sand.u32 %s185, 1
        %s584 = smul.addr %s583, 16
        %s585 = scalar_lea.vmem [#allocation8], %s584
        // Predicated region
        $region61: #{tpu_custom_call.1} parent=47 // pred_check
          %p586 = pneg %p195
        $region62: #{tpu_custom_call.1} parent=47 // pred_check_branch
          %588 = sbr.rel (%p586) target = $region64
        $region63: #{tpu_custom_call.1} parent=47 // pred_region
          %s589 = smul.u32 2, %s25
          %s591 = ssub.s32 256, 256
          %592 = vsyncadd %s582, %s591
          %s593 = smul.addr %s589, 128
          %s594 = scalar_lea.hbm %s7, %s593
          %s595 = sshll.u32 %s585, 4
          %s596 = int_to_ptr.vmem [resolvable:$true] %s595
          %601 = dma.vmem_to_hbm [thread:$0]  %s596, 256, %s594, %s582, 128, 128, 8
        $region64: #{tpu_custom_call.1} parent=47 // pred_fallthru
          _
      $region48: #{tpu_custom_call.1} parent=5 // pred_fallthru
        _
      %p602 = scmp.le.s32.totalorder 2, %s20
      // Predicated region
      $region65: #{tpu_custom_call.1} parent=5 // pred_check
        %p603 = pneg %p602
      $region66: #{tpu_custom_call.1} parent=5 // pred_check_branch
        %605 = sbr.rel (%p603) target = $region68
      $region67: #{tpu_custom_call.1} parent=5 // pred_region
        %s606 = ssub.s32 %s20, 2
        // Predicated region
        $region69: #{tpu_custom_call.1} parent=67 // pred_check
          %p607 = pneg %p201
        $region70: #{tpu_custom_call.1} parent=67 // pred_check_branch
          %609 = sbr.rel (%p607) target = $region72
        $region71: #{tpu_custom_call.1} parent=67 // pred_region
          %s610 = sand.u32 %s186, 1
          %s611 = scalar_lea.sflag [#allocation4], %s610
          %s612 = sand.u32 %s186, 1
          %s613 = smul.addr %s612, 16
          %s614 = scalar_lea.vmem [#allocation8], %s613
          %615 = dma.done %s611, 256
        $region72: #{tpu_custom_call.1} parent=67 // pred_fallthru
          _
      $region68: #{tpu_custom_call.1} parent=5 // pred_fallthru
        _
    $region6: #{tpu_custom_call.1} parent=1 // loop_footer
      %s24 = sadd.s32 1, %s20
    $region7: #{tpu_custom_call.1} parent=1 // loop_footer_branch
      %19 = sbr.rel target = $region3
    $region8: #{tpu_custom_call.1} parent=1 // loop_exit
      _
    %616 = vsyncpa [#allocation3], 1
    %s617 = scalar_lea.sflag [#allocation3], 1
    %618 = vsyncpa %s617, 1
    %619 = vsyncpa [#allocation6], 1
    %620 = vsyncpa [#allocation4], 1
    %s621 = scalar_lea.sflag [#allocation4], 1
    %622 = vsyncpa %s621, 1

</llo_original>
